<compile_context>
chip_gen: v7x
topology: tpu7x:2x2x1
jax: 0.10.0
libtpu: 0.0.40
codegen_flags: <defaults>
</compile_context>

<pallas_src>
import functools

import jax
import jax.numpy as jnp
from jax.experimental import pallas as pl
from jax.experimental.pallas import tpu as pltpu


def _round_up(x, m):
    return (x + m - 1) // m * m


def _ffn_kernel(x_ref, w1_ref, b1_ref, w2_ref, b2_ref, o_ref, acc_ref):
    f = pl.program_id(1)
    nf = pl.num_programs(1)

    @pl.when(f == 0)
    def _():
        acc_ref[...] = jnp.zeros_like(acc_ref)

    # First GEMM tile: bf16 operands on the MXU, f32 accumulation.
    h = jnp.dot(x_ref[...].astype(jnp.bfloat16), w1_ref[...],
                preferred_element_type=jnp.float32)
    # Bias + ReLU stay f32 (VPU filler; v5e has no bf16 VPU path).
    h = jnp.maximum(h + b1_ref[...], 0.0)

    # Second GEMM tile: deliberate bf16 downcast of the hidden activation so
    # both MXU operands are bf16.
    partial = jnp.dot(h.astype(w2_ref.dtype), w2_ref[...],
                      preferred_element_type=jnp.float32)

    @pl.when(f < nf - 1)
    def _():
        acc_ref[...] += partial

    # Final F step: fold the last partial + b2 straight into the store
    # (saves a full TMxE f32 accumulator read-modify-write pass).
    @pl.when(f == nf - 1)
    def _():
        o_ref[...] = (acc_ref[...] + partial + b2_ref[...]).astype(o_ref.dtype)


def prepare_ffn_params(w1, b1, w2, b2, weight_dtype=jnp.bfloat16):
    """Pad weights to 128-multiples and cast to bf16 ONCE, outside the hot path."""
    E, F = w1.shape
    E_pad = _round_up(E, 128)
    F_pad = _round_up(F, 128)
    w1p = jnp.pad(w1, ((0, E_pad - E), (0, F_pad - F))).astype(weight_dtype)
    w2p = jnp.pad(w2, ((0, F_pad - F), (0, E_pad - E))).astype(weight_dtype)
    b1p = jnp.pad(b1.reshape(1, F), ((0, 0), (0, F_pad - F))).astype(jnp.float32)
    b2p = jnp.pad(b2.reshape(1, E), ((0, 0), (0, E_pad - E))).astype(jnp.float32)
    return w1p, b1p, w2p, b2p


def _choose_tiles(M, E_pad, F_pad, x_itemsize, out_itemsize, tm, tf, budget):
    # Row tile: 16-row multiple (bf16 packs 16 sublanes per vreg).
    TM = min(tm, _round_up(M, 16))
    # Prefer >= 2 M tiles so v7x's two TensorCores both get work on the
    # "parallel" axis (costs one extra weight stream on single-TC parts).
    if M >= 32 and _round_up(M, TM) == TM:
        TM = min(TM, _round_up((M + 1) // 2, 16))

    def est(tm_, tf_):
        return (2 * tm_ * E_pad * x_itemsize       # x tile (double-buffered)
                + 2 * E_pad * tf_ * 2              # W1 tile (bf16, double-buffered)
                + 2 * tf_ * E_pad * 2              # W2 tile (bf16, double-buffered)
                + 2 * tm_ * E_pad * out_itemsize   # out tile (double-buffered)
                + tm_ * E_pad * 4                  # f32 accumulator scratch
                + tm_ * tf_ * 4                    # f32 hidden-tile intermediate
                + 4 * (tf_ + E_pad) * 4)           # biases (generous)

    while TM > 16 and est(TM, 128) > budget:
        TM = max(16, _round_up(TM // 2, 16))

    TF = min(tf, F_pad)
    while TF > 128 and (F_pad % TF != 0 or est(TM, TF) > budget):
        TF -= 128

    return TM, TF, est(TM, TF)


def position_wise_feed_forward(x, w1p, b1p, w2p, b2p, *,
                               tm=1024, tf=512,
                               vmem_budget_bytes=48 * 1024 * 1024):
    """x: [..., E] -> [..., E], relu(x @ W1 + b1) @ W2 + b2 (weights pre-padded/bf16)."""
    orig_shape = x.shape
    E = orig_shape[-1]
    E_pad, F_pad = w1p.shape

    x2d = x.reshape(-1, E)
    M = x2d.shape[0]
    x_itemsize = jnp.dtype(x.dtype).itemsize

    TM, TF, est_bytes = _choose_tiles(M, E_pad, F_pad, x_itemsize, x_itemsize,
                                      tm, tf, vmem_budget_bytes)
    M_pad = _round_up(M, TM)

    # Zero-pad x only when needed (zeros are exact for this FFN).
    if M_pad != M or E_pad != E:
        xp = jnp.pad(x2d, ((0, M_pad - M), (0, E_pad - E)))
    else:
        xp = x2d

    grid = (M_pad // TM, F_pad // TF)

    # Explicit scoped-VMEM request: enough for the working set (v5e default is
    # only 16 MiB) but capped well below v7x's 64 MiB physical VMEM.
    vmem_limit = int(min(max(2 * est_bytes, 32 * 1024 * 1024), 56 * 1024 * 1024))

    out = pl.pallas_call(
        _ffn_kernel,
        out_shape=jax.ShapeDtypeStruct((M_pad, E_pad), x.dtype),
        grid=grid,
        in_specs=[
            pl.BlockSpec((TM, E_pad), lambda i, f: (i, 0)),   # x row tile (streamed)
            pl.BlockSpec((E_pad, TF), lambda i, f: (0, f)),   # W1 column tile (bf16)
            pl.BlockSpec((1, TF), lambda i, f: (0, f)),       # b1 tile (f32)
            pl.BlockSpec((TF, E_pad), lambda i, f: (f, 0)),   # W2 row tile (bf16)
            pl.BlockSpec((1, E_pad), lambda i, f: (0, 0)),    # b2 (resident, f32)
        ],
        out_specs=pl.BlockSpec((TM, E_pad), lambda i, f: (i, 0)),
        scratch_shapes=[pltpu.VMEM((TM, E_pad), jnp.float32)],
        compiler_params=pltpu.CompilerParams(
            dimension_semantics=("parallel", "arbitrary"),
            vmem_limit_bytes=vmem_limit),
    )(xp, w1p, b1p, w2p, b2p)

    if M_pad != M or E_pad != E:
        out = out[:M, :E]
    return out.reshape(orig_shape)


def init_params(key, embedding_dim, ff_dim, dtype=jnp.float32):
    """Deterministic init mimicking nn.Linear's uniform(-1/sqrt(fan_in), ...)."""
    k1, k2, k3, k4 = jax.random.split(key, 4)
    lim1 = 1.0 / jnp.sqrt(embedding_dim)
    lim2 = 1.0 / jnp.sqrt(ff_dim)
    # Stored transposed relative to PyTorch (out,in) so the kernel right-multiplies.
    w1 = jax.random.uniform(k1, (embedding_dim, ff_dim), dtype, -lim1, lim1)
    b1 = jax.random.uniform(k2, (ff_dim,), dtype, -lim1, lim1)
    w2 = jax.random.uniform(k3, (ff_dim, embedding_dim), dtype, -lim2, lim2)
    b2 = jax.random.uniform(k4, (embedding_dim,), dtype, -lim2, lim2)
    return w1, b1, w2, b2


if __name__ == "__main__":
    batch, seq, embedding_dim, ff_dim = 2, 8, 32, 64

    key = jax.random.PRNGKey(0)
    kx, kp = jax.random.split(key)
    x = jax.random.normal(kx, (batch, seq, embedding_dim), jnp.float32)
    w1, b1, w2, b2 = init_params(kp, embedding_dim, ff_dim)

    # One-time weight prep (padding + bf16 cast) outside the hot path.
    params = prepare_ffn_params(w1, b1, w2, b2)

    ffn = jax.jit(functools.partial(position_wise_feed_forward, *(() ), ))
    ffn = jax.jit(lambda xx: position_wise_feed_forward(xx, *params))
    out = jax.block_until_ready(ffn(x))

    # Reference in plain JAX (full f32); kernel uses bf16 MXU operands, so use
    # a bf16-appropriate tolerance.
    ref = jnp.maximum(x @ w1 + b1, 0.0) @ w2 + b2
    assert out.shape == (batch, seq, embedding_dim)
    assert jnp.allclose(out, ref, atol=3e-2, rtol=3e-2), (
        float(jnp.max(jnp.abs(out - ref))))

    print("KERNEL_OK")
</pallas_src>

<mosaic_0001>
module attributes {stable_mosaic.version = 11 : i64} {
  func.func @_ffn_kernel(%arg0: i32, %arg1: i32, %arg2: memref<16x128xf32, #tpu.memory_space<vmem>>, %arg3: memref<128x128xbf16, #tpu.memory_space<vmem>>, %arg4: memref<1x128xf32, #tpu.memory_space<vmem>>, %arg5: memref<128x128xbf16, #tpu.memory_space<vmem>>, %arg6: memref<1x128xf32, #tpu.memory_space<vmem>>, %arg7: memref<16x128xf32, #tpu.memory_space<vmem>>, %arg8: memref<16x128xf32, #tpu.memory_space<vmem>>) attributes {dimension_semantics = [#tpu.dimension_semantics<parallel>, #tpu.dimension_semantics<arbitrary>], iteration_bounds = array<i64: 1, 1>, scalar_prefetch = 0 : i64, scratch_operands = 1 : i64, tpu.core_type = #tpu.core_type<tc>, window_params = [{transform_indices = @transform_0, window_bounds = array<i64: 16, 128>}, {transform_indices = @transform_1, window_bounds = array<i64: 128, 128>}, {transform_indices = @transform_2, window_bounds = array<i64: 1, 128>}, {transform_indices = @transform_3, window_bounds = array<i64: 128, 128>}, {pipeline_mode = #tpu.pipeline_mode<synchronous>, transform_indices = @transform_4, window_bounds = array<i64: 1, 128>}, {transform_indices = @transform_5, window_bounds = array<i64: 16, 128>}]} {
    %c0_i32 = arith.constant 0 : i32
    %0 = arith.cmpi eq, %arg1, %c0_i32 : i32
    %1 = arith.extui %0 : i1 to i32
    %c0_i32_0 = arith.constant 0 : i32
    %2 = arith.cmpi ne, %1, %c0_i32_0 : i32
    scf.if %2 {
      %cst_14 = arith.constant 0.000000e+00 : f32
      %21 = vector.broadcast %cst_14 : f32 to vector<16x128xf32>
      %c0_15 = arith.constant 0 : index
      %c0_16 = arith.constant 0 : index
      %22 = vector.load %arg8[%c0_15, %c0_16] : memref<16x128xf32, #tpu.memory_space<vmem>>, vector<16x128xf32>
      tpu.vector_store %arg8[%c0_15, %c0_16], %21 {strides = array<i32>} : memref<16x128xf32, #tpu.memory_space<vmem>>, vector<16x128xf32>,
    } else {
    }
    %c0 = arith.constant 0 : index
    %c0_1 = arith.constant 0 : index
    %3 = vector.load %arg2[%c0, %c0_1] : memref<16x128xf32, #tpu.memory_space<vmem>>, vector<16x128xf32>
    %4 = arith.truncf %3 : vector<16x128xf32> to vector<16x128xbf16>
    %c0_2 = arith.constant 0 : index
    %c0_3 = arith.constant 0 : index
    %5 = vector.load %arg3[%c0_2, %c0_3] : memref<128x128xbf16, #tpu.memory_space<vmem>>, vector<128x128xbf16>
    %cst = arith.constant dense<0.000000e+00> : vector<16x128xf32>
    %6 = tpu.matmul %4, %5, %cst {dimension_numbers = #tpu.dot_dimension_numbers<[1], [0], [0], [1], [0, 0, 1, 1], [], []>} : vector<16x128xbf16>, vector<128x128xbf16>, vector<16x128xf32> -> vector<16x128xf32>
    %c0_4 = arith.constant 0 : index
    %c0_5 = arith.constant 0 : index
    %7 = vector.load %arg4[%c0_4, %c0_5] : memref<1x128xf32, #tpu.memory_space<vmem>>, vector<1x128xf32>
    %8 = vector.broadcast %7 : vector<1x128xf32> to vector<16x128xf32>
    %9 = arith.addf %6, %8 : vector<16x128xf32>
    %cst_6 = arith.constant 0.000000e+00 : f32
    %10 = vector.broadcast %cst_6 : f32 to vector<16x128xf32>
    %11 = arith.maximumf %9, %10 : vector<16x128xf32>
    %12 = arith.truncf %11 : vector<16x128xf32> to vector<16x128xbf16>
    %c0_7 = arith.constant 0 : index
    %c0_8 = arith.constant 0 : index
    %13 = vector.load %arg5[%c0_7, %c0_8] : memref<128x128xbf16, #tpu.memory_space<vmem>>, vector<128x128xbf16>
    %cst_9 = arith.constant dense<0.000000e+00> : vector<16x128xf32>
    %14 = tpu.matmul %12, %13, %cst_9 {dimension_numbers = #tpu.dot_dimension_numbers<[1], [0], [0], [1], [0, 0, 1, 1], [], []>} : vector<16x128xbf16>, vector<128x128xbf16>, vector<16x128xf32> -> vector<16x128xf32>
    %c0_i32_10 = arith.constant 0 : i32
    %15 = arith.cmpi slt, %arg1, %c0_i32_10 : i32
    %16 = arith.extui %15 : i1 to i32
    %c0_i32_11 = arith.constant 0 : i32
    %17 = arith.cmpi ne, %16, %c0_i32_11 : i32
    scf.if %17 {
      %c0_14 = arith.constant 0 : index
      %c0_15 = arith.constant 0 : index
      %21 = vector.load %arg8[%c0_14, %c0_15] : memref<16x128xf32, #tpu.memory_space<vmem>>, vector<16x128xf32>
      %22 = arith.addf %21, %14 : vector<16x128xf32>
      %c0_16 = arith.constant 0 : index
      %c0_17 = arith.constant 0 : index
      %23 = vector.load %arg8[%c0_16, %c0_17] : memref<16x128xf32, #tpu.memory_space<vmem>>, vector<16x128xf32>
      tpu.vector_store %arg8[%c0_16, %c0_17], %22 {strides = array<i32>} : memref<16x128xf32, #tpu.memory_space<vmem>>, vector<16x128xf32>,
    } else {
    }
    %c0_i32_12 = arith.constant 0 : i32
    %18 = arith.cmpi eq, %arg1, %c0_i32_12 : i32
    %19 = arith.extui %18 : i1 to i32
    %c0_i32_13 = arith.constant 0 : i32
    %20 = arith.cmpi ne, %19, %c0_i32_13 : i32
    scf.if %20 {
      %c0_14 = arith.constant 0 : index
      %c0_15 = arith.constant 0 : index
      %21 = vector.load %arg8[%c0_14, %c0_15] : memref<16x128xf32, #tpu.memory_space<vmem>>, vector<16x128xf32>
      %22 = arith.addf %21, %14 : vector<16x128xf32>
      %c0_16 = arith.constant 0 : index
      %c0_17 = arith.constant 0 : index
      %23 = vector.load %arg6[%c0_16, %c0_17] : memref<1x128xf32, #tpu.memory_space<vmem>>, vector<1x128xf32>
      %24 = vector.broadcast %23 : vector<1x128xf32> to vector<16x128xf32>
      %25 = arith.addf %22, %24 : vector<16x128xf32>
      %c0_18 = arith.constant 0 : index
      %c0_19 = arith.constant 0 : index
      %26 = vector.load %arg7[%c0_18, %c0_19] : memref<16x128xf32, #tpu.memory_space<vmem>>, vector<16x128xf32>
      tpu.vector_store %arg7[%c0_18, %c0_19], %25 {strides = array<i32>} : memref<16x128xf32, #tpu.memory_space<vmem>>, vector<16x128xf32>,
    } else {
    }
    return
  }
  func.func @transform_0(%arg0: i32, %arg1: i32) -> (i32, i32) {
    %c0_i32 = arith.constant 0 : i32
    %c0_i32_0 = arith.constant 0 : i32
    return %arg0, %c0_i32 : i32, i32
  }
  func.func @transform_1(%arg0: i32, %arg1: i32) -> (i32, i32) {
    %c0_i32 = arith.constant 0 : i32
    %c0_i32_0 = arith.constant 0 : i32
    return %c0_i32, %arg1 : i32, i32
  }
  func.func @transform_2(%arg0: i32, %arg1: i32) -> (i32, i32) {
    %c0_i32 = arith.constant 0 : i32
    %c0_i32_0 = arith.constant 0 : i32
    return %c0_i32, %arg1 : i32, i32
  }
  func.func @transform_3(%arg0: i32, %arg1: i32) -> (i32, i32) {
    %c0_i32 = arith.constant 0 : i32
    %c0_i32_0 = arith.constant 0 : i32
    return %arg1, %c0_i32 : i32, i32
  }
  func.func @transform_4(%arg0: i32, %arg1: i32) -> (i32, i32) {
    %c0_i32 = arith.constant 0 : i32
    %c0_i32_0 = arith.constant 0 : i32
    %c0_i32_1 = arith.constant 0 : i32
    return %c0_i32, %c0_i32_0 : i32, i32
  }
  func.func @transform_5(%arg0: i32, %arg1: i32) -> (i32, i32) {
    %c0_i32 = arith.constant 0 : i32
    %c0_i32_0 = arith.constant 0 : i32
    return %arg0, %c0_i32 : i32, i32
  }
}

</mosaic_0001>

<llo_original>
// kernel: _lambda_.1
$region0: #{_lambda_.1}
  #allocation0 [shape = 'u32[]', space=smem, size = 0x4, offset = 0x4, fixed_abs, tag = 'smem constant byte address 0x4 - core index']
  #allocation1 [shape = 'u32[144,128]{1,0:T(1,128)}', space=vmem, size = 0x12000, scoped, tag = 'internal scratch']
  #allocation2 [shape = 'f32[16,128]{1,0:T(8,128)}', space=vmem, size = 0x2000, scoped, tag = 'scratch operand']
  %s0 = inlined_call_operand.vmem [shape: f32[16,128], index: 0, kind: input, shape index: {}]
  %s1 = inlined_call_operand.hbm [shape: bf16[128,128], index: 1, kind: input, shape index: {}]
  %s2 = inlined_call_operand.vmem [shape: f32[1,128], index: 2, kind: input, shape index: {}]
  %s3 = inlined_call_operand.hbm [shape: bf16[128,128], index: 3, kind: input, shape index: {}]
  %s4 = inlined_call_operand.vmem [shape: f32[1,128], index: 4, kind: input, shape index: {}]
  %s5 = inlined_call_operand.vmem [shape: f32[16,128], index: 5, kind: output, shape index: {}]
  %s6 = sld [smem:[#allocation0]]
  $region50: #{_lambda_.1} parent=0
    _
  %s8 = ssub.s32 1, %s6
  %s9 = scalar_select 0, %s8, %s6
  $region1: #{_lambda_.1} parent=0
    #allocation3 [shape = 'u8[32768]{0}', space=vmem, size = 0x8000, scoped, tag = 'input window, operand 1, single buffered']
    #allocation4 [shape = 's32[1]{0}', space=sflag, size = 0x4, scoped, tag = 'scoped memory for _lambda_.1']
    #allocation5 [shape = 'u8[32768]{0}', space=vmem, size = 0x8000, scoped, tag = 'input window, operand 3, single buffered']
    #allocation6 [shape = 's32[1]{0}', space=sflag, size = 0x4, scoped, tag = 'scoped memory for _lambda_.1']
    %10 = vsyncpa [#allocation4], 0
    %11 = vsyncpa [#allocation6], 0
    // Predicated region
    $region2: #{_lambda_.1} parent=1 // pred_check
      _
    $region3: #{_lambda_.1} parent=1 // pred_check_branch
      %13 = sbr.rel (0) target = $region5
    $region4: #{_lambda_.1} parent=1 // pred_region
      _
    $region5: #{_lambda_.1} parent=1 // pred_fallthru
      _
    // Predicated region
    $region6: #{_lambda_.1} parent=1 // pred_check
      _
    $region7: #{_lambda_.1} parent=1 // pred_check_branch
      %15 = sbr.rel (0) target = $region9
    $region8: #{_lambda_.1} parent=1 // pred_region
      %s17 = ssub.s32 1024, 1024
      %18 = vsyncadd [#allocation4], %s17
      %s19 = sshll.u32 [#allocation3], 4
      %s20 = int_to_ptr.vmem [resolvable:$true] %s19
      %25 = dma.hbm_to_vmem [thread:$0]  %s1, 1024, %s20, [#allocation4], 64, 64, 4
    $region9: #{_lambda_.1} parent=1 // pred_fallthru
      _
    // Predicated region
    $region10: #{_lambda_.1} parent=1 // pred_check
      _
    $region11: #{_lambda_.1} parent=1 // pred_check_branch
      %27 = sbr.rel (0) target = $region13
    $region12: #{_lambda_.1} parent=1 // pred_region
      _
    $region13: #{_lambda_.1} parent=1 // pred_fallthru
      _
    // Predicated region
    $region14: #{_lambda_.1} parent=1 // pred_check
      _
    $region15: #{_lambda_.1} parent=1 // pred_check_branch
      %29 = sbr.rel (0) target = $region17
    $region16: #{_lambda_.1} parent=1 // pred_region
      %s31 = ssub.s32 1024, 1024
      %32 = vsyncadd [#allocation6], %s31
      %s33 = sshll.u32 [#allocation5], 4
      %s34 = int_to_ptr.vmem [resolvable:$true] %s33
      %39 = dma.hbm_to_vmem [thread:$0]  %s3, 1024, %s34, [#allocation6], 64, 64, 4
    $region17: #{_lambda_.1} parent=1 // pred_fallthru
      _
    // Predicated region
    $region18: #{_lambda_.1} parent=1 // pred_check
      _
    $region19: #{_lambda_.1} parent=1 // pred_check_branch
      %41 = sbr.rel (0) target = $region21
    $region20: #{_lambda_.1} parent=1 // pred_region
      _
    $region21: #{_lambda_.1} parent=1 // pred_fallthru
      _
    // Predicated region
    $region22: #{_lambda_.1} parent=1 // pred_check
      _
    $region23: #{_lambda_.1} parent=1 // pred_check_branch
      %43 = sbr.rel (0) target = $region25
    $region24: #{_lambda_.1} parent=1 // pred_region
      %44 = dma.done [#allocation4], 1024
    $region25: #{_lambda_.1} parent=1 // pred_fallthru
      _
    // Predicated region
    $region26: #{_lambda_.1} parent=1 // pred_check
      _
    $region27: #{_lambda_.1} parent=1 // pred_check_branch
      %46 = sbr.rel (0) target = $region29
    $region28: #{_lambda_.1} parent=1 // pred_region
      %47 = dma.done [#allocation6], 1024
    $region29: #{_lambda_.1} parent=1 // pred_fallthru
      _
    %p49 = scmp.eq.s32.totalorder 0, 0
    // Predicated region
    $region30: #{_lambda_.1} parent=1 // pred_check
      %p50 = pneg %p49
    $region31: #{_lambda_.1} parent=1 // pred_check_branch
      %52 = sbr.rel (%p50) target = $region33
    $region32: #{_lambda_.1} parent=1 // pred_region
      %53 = vst [vmem:[#allocation2] sm:$0xff] 0.0
      %54 = vst [vmem:[#allocation2 + $0x8] sm:$0xff] 0.0
    $region33: #{_lambda_.1} parent=1 // pred_fallthru
      _
    %v55 = vld [vmem:[%s0] sm:$0xff]
    %v56 = vld [vmem:[%s0 + $0x8] sm:$0xff]
    %v57 = vpack.c.bf16 %v56, %v55
    %v58 = vld [vmem:[#allocation3] sm:$0xf]
    %v59 = vld [vmem:[#allocation3 + $0x4] sm:$0xf]
    %v60 = vld [vmem:[#allocation3 + $0x8] sm:$0xf]
    %v61 = vld [vmem:[#allocation3 + $0xc] sm:$0xf]
    %v62 = vld [vmem:[#allocation3 + $0x10] sm:$0xf]
    %v63 = vld [vmem:[#allocation3 + $0x14] sm:$0xf]
    %v64 = vld [vmem:[#allocation3 + $0x18] sm:$0xf]
    %v65 = vld [vmem:[#allocation3 + $0x1c] sm:$0xf]
    %v66 = vld [vmem:[#allocation3 + $0x20] sm:$0xf]
    %v67 = vld [vmem:[#allocation3 + $0x24] sm:$0xf]
    %v68 = vld [vmem:[#allocation3 + $0x28] sm:$0xf]
    %v69 = vld [vmem:[#allocation3 + $0x2c] sm:$0xf]
    %v70 = vld [vmem:[#allocation3 + $0x30] sm:$0xf]
    %v71 = vld [vmem:[#allocation3 + $0x34] sm:$0xf]
    %v72 = vld [vmem:[#allocation3 + $0x38] sm:$0xf]
    %v73 = vld [vmem:[#allocation3 + $0x3c] sm:$0xf]
    %v74 = vld [vmem:[%s2] sm:$0x1]
    %v76 = vlaneseq
    %v77 = vshrl.u32 %v76, 7
    %v78 = vsub.s32 0, %v77
    %v79 = vrot.slane %v74, %v78
    %v97 = vunpack.c.l.b16 %v58
    %v98 = vunpack.c.l.b16 %v59
    %v99 = vunpack.c.l.b16 %v60
    %v100 = vunpack.c.l.b16 %v61
    %v101 = vunpack.c.l.b16 %v62
    %v102 = vunpack.c.l.b16 %v63
    %v103 = vunpack.c.l.b16 %v64
    %v104 = vunpack.c.l.b16 %v65
    %v105 = vunpack.c.l.b16 %v66
    %v106 = vunpack.c.l.b16 %v67
    %v107 = vunpack.c.l.b16 %v68
    %v108 = vunpack.c.l.b16 %v69
    %v109 = vunpack.c.l.b16 %v70
    %v110 = vunpack.c.l.b16 %v71
    %v111 = vunpack.c.l.b16 %v72
    %v112 = vunpack.c.l.b16 %v73
    %v113 = vpack.c.b16 %v98, %v97
    %v114 = vpack.c.b16 %v100, %v99
    %v115 = vpack.c.b16 %v102, %v101
    %v116 = vpack.c.b16 %v104, %v103
    %v117 = vpack.c.b16 %v106, %v105
    %v118 = vpack.c.b16 %v108, %v107
    %v119 = vpack.c.b16 %v110, %v109
    %v120 = vpack.c.b16 %v112, %v111
    %129 = vmatprep.subr.bf16.mxu0 0
    %130 = vmatpush1.bf16.msra.mxu0 %v113
    %131 = vmatprep.subr.bf16.mxu0 0
    %132 = vmatpush1.bf16.msra.mxu0 %v114
    %133 = vmatprep.subr.bf16.mxu0 0
    %134 = vmatpush1.bf16.msra.mxu0 %v115
    %135 = vmatprep.subr.bf16.mxu0 0
    %136 = vmatpush1.bf16.msra.mxu0 %v116
    %137 = vmatprep.subr.bf16.mxu0 0
    %138 = vmatpush1.bf16.msra.mxu0 %v117
    %139 = vmatprep.subr.bf16.mxu0 0
    %140 = vmatpush1.bf16.msra.mxu0 %v118
    %141 = vmatprep.subr.bf16.mxu0 0
    %142 = vmatpush1.bf16.msra.mxu0 %v119
    %143 = vmatprep.subr.bf16.mxu0 0
    %144 = vmatpush1.bf16.msra.mxu0 %v120
    %145 = vmatprep.subr.bf16.mxu0 0
    %146 = vmatpush1.bf16.msra.mxu0 0
    %147 = vmatprep.subr.bf16.mxu0 0
    %148 = vmatpush1.bf16.msra.mxu0 0
    %149 = vmatprep.subr.bf16.mxu0 0
    %150 = vmatpush1.bf16.msra.mxu0 0
    %151 = vmatprep.subr.bf16.mxu0 0
    %152 = vmatpush1.bf16.msra.mxu0 0
    %153 = vmatprep.subr.bf16.mxu0 0
    %154 = vmatpush1.bf16.msra.mxu0 0
    %155 = vmatprep.subr.bf16.mxu0 0
    %156 = vmatpush1.bf16.msra.mxu0 0
    %157 = vmatprep.subr.bf16.mxu0 0
    %158 = vmatpush1.bf16.msra.mxu0 0
    %159 = vmatprep.subr.bf16.mxu0 0
    %160 = vmatpush1.bf16.msra.mxu0 0
    %161 = vmatprep.mubr.bf16.mxu0 0
    %162 = vmatmul.mubr.bf16.gmra.mrb[0].mxu0 %v57
    %v163 = vpop.f32.mrb[0].mxu0
    %v164 = vadd.f32 %v79, %v163
    %v165 = vpop.f32.mrb[0].mxu0
    %v166 = vpop.f32.mrb[0].mxu0
    %v167 = vadd.f32 %v79, %v166
    %v168 = vpop.f32.mrb[0].mxu0
    %169 = vdwg.mxu0
    %v170 = vmax.f32 %v164, 0.0
    %v171 = vmax.f32 %v167, 0.0
    %v172 = vpack.c.bf16 %v171, %v170
    %v173 = vld [vmem:[#allocation5] sm:$0xf]
    %v174 = vld [vmem:[#allocation5 + $0x4] sm:$0xf]
    %v175 = vld [vmem:[#allocation5 + $0x8] sm:$0xf]
    %v176 = vld [vmem:[#allocation5 + $0xc] sm:$0xf]
    %v177 = vld [vmem:[#allocation5 + $0x10] sm:$0xf]
    %v178 = vld [vmem:[#allocation5 + $0x14] sm:$0xf]
    %v179 = vld [vmem:[#allocation5 + $0x18] sm:$0xf]
    %v180 = vld [vmem:[#allocation5 + $0x1c] sm:$0xf]
    %v181 = vld [vmem:[#allocation5 + $0x20] sm:$0xf]
    %v182 = vld [vmem:[#allocation5 + $0x24] sm:$0xf]
    %v183 = vld [vmem:[#allocation5 + $0x28] sm:$0xf]
    %v184 = vld [vmem:[#allocation5 + $0x2c] sm:$0xf]
    %v185 = vld [vmem:[#allocation5 + $0x30] sm:$0xf]
    %v186 = vld [vmem:[#allocation5 + $0x34] sm:$0xf]
    %v187 = vld [vmem:[#allocation5 + $0x38] sm:$0xf]
    %v188 = vld [vmem:[#allocation5 + $0x3c] sm:$0xf]
    %v205 = vunpack.c.l.b16 %v173
    %v206 = vunpack.c.l.b16 %v174
    %v207 = vunpack.c.l.b16 %v175
    %v208 = vunpack.c.l.b16 %v176
    %v209 = vunpack.c.l.b16 %v177
    %v210 = vunpack.c.l.b16 %v178
    %v211 = vunpack.c.l.b16 %v179
    %v212 = vunpack.c.l.b16 %v180
    %v213 = vunpack.c.l.b16 %v181
    %v214 = vunpack.c.l.b16 %v182
    %v215 = vunpack.c.l.b16 %v183
    %v216 = vunpack.c.l.b16 %v184
    %v217 = vunpack.c.l.b16 %v185
    %v218 = vunpack.c.l.b16 %v186
    %v219 = vunpack.c.l.b16 %v187
    %v220 = vunpack.c.l.b16 %v188
    %v221 = vpack.c.b16 %v206, %v205
    %v222 = vpack.c.b16 %v208, %v207
    %v223 = vpack.c.b16 %v210, %v209
    %v224 = vpack.c.b16 %v212, %v211
    %v225 = vpack.c.b16 %v214, %v213
    %v226 = vpack.c.b16 %v216, %v215
    %v227 = vpack.c.b16 %v218, %v217
    %v228 = vpack.c.b16 %v220, %v219
    %237 = vmatprep.subr.bf16.mxu0 0
    %238 = vmatpush1.bf16.msra.mxu0 %v221
    %239 = vmatprep.subr.bf16.mxu0 0
    %240 = vmatpush1.bf16.msra.mxu0 %v222
    %241 = vmatprep.subr.bf16.mxu0 0
    %242 = vmatpush1.bf16.msra.mxu0 %v223
    %243 = vmatprep.subr.bf16.mxu0 0
    %244 = vmatpush1.bf16.msra.mxu0 %v224
    %245 = vmatprep.subr.bf16.mxu0 0
    %246 = vmatpush1.bf16.msra.mxu0 %v225
    %247 = vmatprep.subr.bf16.mxu0 0
    %248 = vmatpush1.bf16.msra.mxu0 %v226
    %249 = vmatprep.subr.bf16.mxu0 0
    %250 = vmatpush1.bf16.msra.mxu0 %v227
    %251 = vmatprep.subr.bf16.mxu0 0
    %252 = vmatpush1.bf16.msra.mxu0 %v228
    %253 = vmatprep.subr.bf16.mxu0 0
    %254 = vmatpush1.bf16.msra.mxu0 0
    %255 = vmatprep.subr.bf16.mxu0 0
    %256 = vmatpush1.bf16.msra.mxu0 0
    %257 = vmatprep.subr.bf16.mxu0 0
    %258 = vmatpush1.bf16.msra.mxu0 0
    %259 = vmatprep.subr.bf16.mxu0 0
    %260 = vmatpush1.bf16.msra.mxu0 0
    %261 = vmatprep.subr.bf16.mxu0 0
    %262 = vmatpush1.bf16.msra.mxu0 0
    %263 = vmatprep.subr.bf16.mxu0 0
    %264 = vmatpush1.bf16.msra.mxu0 0
    %265 = vmatprep.subr.bf16.mxu0 0
    %266 = vmatpush1.bf16.msra.mxu0 0
    %267 = vmatprep.subr.bf16.mxu0 0
    %268 = vmatpush1.bf16.msra.mxu0 0
    %269 = vmatprep.mubr.bf16.mxu0 0
    %270 = vmatmul.mubr.bf16.gmra.mrb[0].mxu0 %v172
    %v271 = vpop.f32.mrb[0].mxu0
    %v272 = vadd.f32 0.0, %v271
    %v273 = vpop.f32.mrb[0].mxu0
    %v274 = vpop.f32.mrb[0].mxu0
    %v275 = vadd.f32 0.0, %v274
    %v276 = vpop.f32.mrb[0].mxu0
    %277 = vdwg.mxu0
    %p278 = scmp.lt.s32.totalorder 0, 0
    // Predicated region
    $region34: #{_lambda_.1} parent=1 // pred_check
      %p279 = pneg %p278
    $region35: #{_lambda_.1} parent=1 // pred_check_branch
      %281 = sbr.rel (%p279) target = $region37
    $region36: #{_lambda_.1} parent=1 // pred_region
      %v282 = vld [vmem:[#allocation2] sm:$0xff]
      %v283 = vld [vmem:[#allocation2 + $0x8] sm:$0xff]
      %v284 = vadd.f32 %v282, %v272
      %v285 = vadd.f32 %v283, %v275
      %286 = vst [vmem:[#allocation2] sm:$0xff] %v284
      %287 = vst [vmem:[#allocation2 + $0x8] sm:$0xff] %v285
    $region37: #{_lambda_.1} parent=1 // pred_fallthru
      _
    // Predicated region
    $region38: #{_lambda_.1} parent=1 // pred_check
      %p288 = pneg %p49
    $region39: #{_lambda_.1} parent=1 // pred_check_branch
      %290 = sbr.rel (%p288) target = $region41
    $region40: #{_lambda_.1} parent=1 // pred_region
      %v291 = vld [vmem:[#allocation2] sm:$0xff]
      %v292 = vld [vmem:[#allocation2 + $0x8] sm:$0xff]
      %v293 = vadd.f32 %v291, %v272
      %v294 = vadd.f32 %v292, %v275
      %v295 = vld [vmem:[%s4] sm:$0x1]
      %v297 = vlaneseq
      %v298 = vshrl.u32 %v297, 7
      %v299 = vsub.s32 0, %v298
      %v300 = vrot.slane %v295, %v299
      %v302 = vadd.f32 %v293, %v300
      %v303 = vadd.f32 %v294, %v300
      %304 = vst [vmem:[%s5] sm:$0xff] %v302
      %305 = vst [vmem:[%s5 + $0x8] sm:$0xff] %v303
    $region41: #{_lambda_.1} parent=1 // pred_fallthru
      _
    // Predicated region
    $region42: #{_lambda_.1} parent=1 // pred_check
      _
    $region43: #{_lambda_.1} parent=1 // pred_check_branch
      %307 = sbr.rel (0) target = $region45
    $region44: #{_lambda_.1} parent=1 // pred_region
      _
    $region45: #{_lambda_.1} parent=1 // pred_fallthru
      _
    // Predicated region
    $region46: #{_lambda_.1} parent=1 // pred_check
      _
    $region47: #{_lambda_.1} parent=1 // pred_check_branch
      %309 = sbr.rel (0) target = $region49
    $region48: #{_lambda_.1} parent=1 // pred_region
      _
    $region49: #{_lambda_.1} parent=1 // pred_fallthru
      _
    %310 = vsyncpa [#allocation4], 1
    %311 = vsyncpa [#allocation6], 1

</llo_original>
